<compile_context>
chip_gen: v6e
topology: v6e:2x2x1
jax: 0.10.0
libtpu: 0.0.40
codegen_flags: <defaults>
</compile_context>

<pallas_src>
import jax
import jax.numpy as jnp
from jax.experimental import pallas as pl
from jax.experimental.pallas import tpu as pltpu


def _round_up(x, m):
    return (x + m - 1) // m * m


def seg_triangle_kernel(x_ref, p_ref, o_ref):
    x = x_ref[...]                  # (TM, 1)  f32
    params = p_ref[...]             # (4, S)   f32 rows: pos, a, b, c
    pos = params[0:1, :]
    a = params[1:2, :]
    b = params[2:3, :]
    c = params[3:4, :]
    d = x - pos                     # broadcast -> (TM, S)
    out = a * d + b * jnp.abs(d) + c
    # seu activation: sigmoid(out) * out  ==  out / (1 + exp(-out))
    out = out / (1.0 + jnp.exp(-out))
    o_ref[...] = out.astype(o_ref.dtype)


def seg_triangle_layer(x, left_pos, middle_pos, middle_seg_width, right_pos,
                       *, block_m=512):
    """x: (N, 1) float array. Returns (N, seg_num) = seu(concat(segments))."""
    x = jnp.asarray(x, jnp.float32)
    n = x.shape[0]

    # Build per-segment coefficient vectors ONCE (hoisted out of the kernel).
    if middle_pos is None:
        seg_num = 2
        pos = jnp.concatenate([left_pos, right_pos]).astype(jnp.float32)
        a = jnp.array([-1.0, 1.0], jnp.float32)
        b = jnp.zeros((2,), jnp.float32)
        c = jnp.zeros((2,), jnp.float32)
    else:
        m = middle_pos.shape[0]
        seg_num = 2 + m
        pos = jnp.concatenate([left_pos, middle_pos, right_pos]).astype(jnp.float32)
        a = jnp.concatenate(
            [-jnp.ones((1,)), jnp.zeros((m,)), jnp.ones((1,))]).astype(jnp.float32)
        b = jnp.concatenate(
            [jnp.zeros((1,)), -jnp.ones((m,)), jnp.zeros((1,))]).astype(jnp.float32)
        c = jnp.concatenate(
            [jnp.zeros((1,)), middle_seg_width, jnp.zeros((1,))]).astype(jnp.float32)
    params = jnp.stack([pos, a, b, c], axis=0)      # (4, S)

    # Tile the batch; pad N up to a multiple of the tile so every block is full.
    tm = min(block_m, _round_up(n, 8))
    n_pad = _round_up(n, tm)
    if n_pad != n:
        x = jnp.pad(x, ((0, n_pad - n), (0, 0)))

    out = pl.pallas_call(
        seg_triangle_kernel,
        out_shape=jax.ShapeDtypeStruct((n_pad, seg_num), jnp.float32),
        grid=(n_pad // tm,),
        in_specs=[
            pl.BlockSpec((tm, 1), lambda i: (i, 0)),          # x tile
            pl.BlockSpec((4, seg_num), lambda i: (0, 0)),     # params (replicated)
        ],
        out_specs=pl.BlockSpec((tm, seg_num), lambda i: (i, 0)),
        compiler_params=pltpu.CompilerParams(
            dimension_semantics=("parallel",)),
    )(x, params)
    return out[:n]


if __name__ == "__main__":
    key = jax.random.PRNGKey(0)
    k_x, k_mid = jax.random.split(key)

    batch = 100
    seg_num = 16
    lo, hi = 0.0, 1.0
    seg_width = (hi - lo) / seg_num
    left = lo + seg_width
    right = hi - seg_width

    # Parameters, mirroring the PyTorch __init__:
    left_pos = jnp.full((1,), left, jnp.float32)
    right_pos = jnp.full((1,), right, jnp.float32)
    middle_pos = jax.random.uniform(k_mid, (seg_num - 2,), jnp.float32,
                                    minval=left, maxval=right - seg_width)
    middle_seg_width = jnp.full((seg_num - 2,), seg_width, jnp.float32)

    x = jax.random.uniform(k_x, (batch, 1), jnp.float32, minval=lo, maxval=hi)

    out = seg_triangle_layer(x, left_pos, middle_pos, middle_seg_width,
                             right_pos, block_m=32)
    out = jax.block_until_ready(out)

    # Plain-JAX reference, mirroring the PyTorch forward exactly.
    left_out = left_pos - x                                     # (N, 1)
    middle_out = -jnp.abs(x - middle_pos) + middle_seg_width    # (N, seg_num-2)
    right_out = x - right_pos                                   # (N, 1)
    ref = jnp.concatenate([left_out, middle_out, right_out], axis=-1)
    ref = jax.nn.sigmoid(ref) * ref                             # seu

    assert out.shape == (batch, seg_num)
    assert jnp.allclose(out, ref, atol=1e-5, rtol=1e-5)

    print("KERNEL_OK")
</pallas_src>

<mosaic_0001>
module attributes {stable_mosaic.version = 11 : i64} {
  func.func @seg_triangle_kernel(%arg0: i32, %arg1: memref<32x1xf32, #tpu.memory_space<vmem>>, %arg2: memref<4x16xf32, #tpu.memory_space<vmem>>, %arg3: memref<32x16xf32, #tpu.memory_space<vmem>>) attributes {dimension_semantics = [#tpu.dimension_semantics<parallel>], iteration_bounds = array<i64: 4>, scalar_prefetch = 0 : i64, scratch_operands = 0 : i64, tpu.core_type = #tpu.core_type<tc>, window_params = [{transform_indices = @transform_0, window_bounds = array<i64: 32, 1>}, {pipeline_mode = #tpu.pipeline_mode<synchronous>, transform_indices = @transform_1, window_bounds = array<i64: 4, 16>}, {transform_indices = @transform_2, window_bounds = array<i64: 32, 16>}]} {
    %c0 = arith.constant 0 : index
    %c0_0 = arith.constant 0 : index
    %0 = vector.load %arg1[%c0, %c0_0] : memref<32x1xf32, #tpu.memory_space<vmem>>, vector<32x1xf32>
    %c0_1 = arith.constant 0 : index
    %c0_2 = arith.constant 0 : index
    %1 = vector.load %arg2[%c0_1, %c0_2] : memref<4x16xf32, #tpu.memory_space<vmem>>, vector<4x16xf32>
    %2 = vector.extract_strided_slice %1 {offsets = [0, 0], sizes = [1, 16], strides = [1, 1]} : vector<4x16xf32> to vector<1x16xf32>
    %3 = vector.extract_strided_slice %1 {offsets = [1, 0], sizes = [1, 16], strides = [1, 1]} : vector<4x16xf32> to vector<1x16xf32>
    %4 = vector.extract_strided_slice %1 {offsets = [2, 0], sizes = [1, 16], strides = [1, 1]} : vector<4x16xf32> to vector<1x16xf32>
    %5 = vector.extract_strided_slice %1 {offsets = [3, 0], sizes = [1, 16], strides = [1, 1]} : vector<4x16xf32> to vector<1x16xf32>
    %6 = vector.broadcast %0 : vector<32x1xf32> to vector<32x16xf32>
    %7 = vector.broadcast %2 : vector<1x16xf32> to vector<32x16xf32>
    %8 = arith.subf %6, %7 : vector<32x16xf32>
    %9 = vector.broadcast %3 : vector<1x16xf32> to vector<32x16xf32>
    %10 = arith.mulf %9, %8 : vector<32x16xf32>
    %11 = math.absf %8 : vector<32x16xf32>
    %12 = vector.broadcast %4 : vector<1x16xf32> to vector<32x16xf32>
    %13 = arith.mulf %12, %11 : vector<32x16xf32>
    %14 = arith.addf %10, %13 : vector<32x16xf32>
    %15 = vector.broadcast %5 : vector<1x16xf32> to vector<32x16xf32>
    %16 = arith.addf %14, %15 : vector<32x16xf32>
    %cst = arith.constant 0.000000e+00 : f32
    %17 = vector.broadcast %cst : f32 to vector<32x16xf32>
    %18 = arith.subf %17, %16 : vector<32x16xf32>
    %19 = math.exp %18 : vector<32x16xf32>
    %cst_3 = arith.constant 1.000000e+00 : f32
    %20 = vector.broadcast %cst_3 : f32 to vector<32x16xf32>
    %21 = arith.addf %20, %19 : vector<32x16xf32>
    %22 = arith.divf %16, %21 : vector<32x16xf32>
    %c0_4 = arith.constant 0 : index
    %c0_5 = arith.constant 0 : index
    %23 = vector.load %arg3[%c0_4, %c0_5] : memref<32x16xf32, #tpu.memory_space<vmem>>, vector<32x16xf32>
    tpu.vector_store %arg3[%c0_4, %c0_5], %22 {strides = array<i32>} : memref<32x16xf32, #tpu.memory_space<vmem>>, vector<32x16xf32>,
    return
  }
  func.func @transform_0(%arg0: i32) -> (i32, i32) {
    %c0_i32 = arith.constant 0 : i32
    %c0_i32_0 = arith.constant 0 : i32
    return %arg0, %c0_i32 : i32, i32
  }
  func.func @transform_1(%arg0: i32) -> (i32, i32) {
    %c0_i32 = arith.constant 0 : i32
    %c0_i32_0 = arith.constant 0 : i32
    %c0_i32_1 = arith.constant 0 : i32
    return %c0_i32, %c0_i32_0 : i32, i32
  }
  func.func @transform_2(%arg0: i32) -> (i32, i32) {
    %c0_i32 = arith.constant 0 : i32
    %c0_i32_0 = arith.constant 0 : i32
    return %arg0, %c0_i32 : i32, i32
  }
}

</mosaic_0001>

<llo_original>
// kernel: tpu_custom_call.1
$region0: #{tpu_custom_call.1}
  #allocation0 [shape = 'u32[]', space=smem, size = 0x4, offset = 0x4, fixed_abs, tag = 'smem constant byte address 0x4 - core index']
  #allocation1 [shape = 'u32[144,128]{1,0:T(1,128)}', space=vmem, size = 0x12000, scoped, tag = 'internal scratch']
  %s0 = inlined_call_operand.vmem [shape: f32[128,1], index: 0, kind: input, shape index: {}]
  %s1 = inlined_call_operand.vmem [shape: f32[4,16], index: 1, kind: input, shape index: {}]
  %s2 = inlined_call_operand.vmem [shape: f32[128,16], index: 2, kind: output, shape index: {}]
  %s3 = sld [smem:[#allocation0]]
  $region41: #{tpu_custom_call.1} parent=0
    _
  %s5 = ssub.s32 1, %s3
  %s6 = scalar_select 0, %s5, %s3
  loop: start=0, step=1, limit=6
  $region2: #{tpu_custom_call.1} parent=0 // loop_pre_header
    _
  $region3: #{tpu_custom_call.1} parent=0 // loop_header
    %s8 = sphi 0, %s12
    %p9 = scmp.ge.s32.totalorder %s8, 6
    %s18 = sphi 0, %s20
    %s21 = sphi 0, %s18
    %s22 = sphi 0, %s21
    %s38 = sphi 0, %s22
    %s42 = sphi 0, %s42
    %s44 = sphi 0, %s42
    %s45 = sphi 0, %s44
    %s59 = sphi 0, %s45
    %s65 = sphi 0, %s67
    %s68 = sphi 0, %s65
    %s69 = sphi 0, %s68
    %s85 = sphi 0, %s69
  $region4: #{tpu_custom_call.1} parent=0 // loop_header_branch
    %11 = sbr.rel (%p9) target = $region8
  $region5: #{tpu_custom_call.1} parent=0 // loop_body
    %s13 = ssub.s32 %s8, 1
    %s14 = ssub.s32 %s8, 2
    %s15 = sadd.s32 %s8, 1
    %s16 = ssub.s32 %s8, %s15
    %p17 = scmp.eq.s32.totalorder %s16, 0
    %s19 = sadd.s32 %s18, 1
    %s20 = scalar_select %p17, %s18, %s19
    %p23 = pneg %p17
    %p24 = scmp.eq.s32.totalorder %s8, 3
    %p25 = por %p23, %p24
    %p26 = scmp.ne.s32.totalorder %s18, %s21
    %p27 = scmp.eq.s32.totalorder %s8, 0
    %p28 = por %p26, %p27
    %p29 = scmp.ne.s32.totalorder %s18, %s21
    %p30 = scmp.eq.s32.totalorder %s13, 3
    %p31 = por %p29, %p30
    %p32 = scmp.ne.s32.totalorder %s21, %s22
    %p33 = scmp.eq.s32.totalorder %s13, 0
    %p34 = por %p32, %p33
    %p35 = scmp.ne.s32.totalorder %s21, %s22
    %p36 = scmp.eq.s32.totalorder %s14, 3
    %p37 = por %p35, %p36
    %p39 = scmp.ne.s32.totalorder %s22, %s38
    %p40 = scmp.eq.s32.totalorder %s14, 0
    %p41 = por %p39, %p40
    %s43 = sadd.s32 %s42, 1
    %p46 = scmp.eq.s32.totalorder %s8, 3
    %p47 = scmp.ne.s32.totalorder %s42, %s44
    %p48 = scmp.eq.s32.totalorder %s8, 0
    %p49 = por %p47, %p48
    %p50 = scmp.ne.s32.totalorder %s42, %s44
    %p51 = scmp.eq.s32.totalorder %s13, 3
    %p52 = por %p50, %p51
    %p53 = scmp.ne.s32.totalorder %s44, %s45
    %p54 = scmp.eq.s32.totalorder %s13, 0
    %p55 = por %p53, %p54
    %p56 = scmp.ne.s32.totalorder %s44, %s45
    %p57 = scmp.eq.s32.totalorder %s14, 3
    %p58 = por %p56, %p57
    %p60 = scmp.ne.s32.totalorder %s45, %s59
    %p61 = scmp.eq.s32.totalorder %s14, 0
    %p62 = por %p60, %p61
    %s63 = ssub.s32 %s8, %s15
    %p64 = scmp.eq.s32.totalorder %s63, 0
    %s66 = sadd.s32 %s65, 1
    %s67 = scalar_select %p64, %s65, %s66
    %p70 = pneg %p64
    %p71 = scmp.eq.s32.totalorder %s8, 3
    %p72 = por %p70, %p71
    %p73 = scmp.ne.s32.totalorder %s65, %s68
    %p74 = scmp.eq.s32.totalorder %s8, 0
    %p75 = por %p73, %p74
    %p76 = scmp.ne.s32.totalorder %s65, %s68
    %p77 = scmp.eq.s32.totalorder %s13, 3
    %p78 = por %p76, %p77
    %p79 = scmp.ne.s32.totalorder %s68, %s69
    %p80 = scmp.eq.s32.totalorder %s13, 0
    %p81 = por %p79, %p80
    %p82 = scmp.ne.s32.totalorder %s68, %s69
    %p83 = scmp.eq.s32.totalorder %s14, 3
    %p84 = por %p82, %p83
    %p86 = scmp.ne.s32.totalorder %s69, %s85
    %p87 = scmp.eq.s32.totalorder %s14, 0
    %p88 = por %p86, %p87
    %p89 = scmp.le.s32.totalorder 1, %s8
    %p90 = scmp.lt.s32.totalorder %s8, 5
    %p91 = pnand %p89, %p90
    %p92 = pneg %p91
    // Predicated region
    $region9: #{tpu_custom_call.1} parent=5 // pred_check
      _
    $region10: #{tpu_custom_call.1} parent=5 // pred_check_branch
      %94 = sbr.rel (%p91) target = $region12
    $region11: #{tpu_custom_call.1} parent=5 // pred_region
      %s95 = ssub.s32 %s8, 1
      // Predicated region
      $region13: #{tpu_custom_call.1} parent=11 // pred_check
        %p96 = pneg %p55
      $region14: #{tpu_custom_call.1} parent=11 // pred_check_branch
        %98 = sbr.rel (%p96) target = $region16
      $region15: #{tpu_custom_call.1} parent=11 // pred_region
        _
      $region16: #{tpu_custom_call.1} parent=11 // pred_fallthru
        _
    $region12: #{tpu_custom_call.1} parent=5 // pred_fallthru
      _
    %p99 = scmp.lt.s32.totalorder %s8, 4
    // Predicated region
    $region17: #{tpu_custom_call.1} parent=5 // pred_check
      %p100 = pneg %p99
    $region18: #{tpu_custom_call.1} parent=5 // pred_check_branch
      %102 = sbr.rel (%p100) target = $region20
    $region19: #{tpu_custom_call.1} parent=5 // pred_region
      // Predicated region
      $region21: #{tpu_custom_call.1} parent=19 // pred_check
        %p103 = pneg %p28
      $region22: #{tpu_custom_call.1} parent=19 // pred_check_branch
        %105 = sbr.rel (%p103) target = $region24
      $region23: #{tpu_custom_call.1} parent=19 // pred_region
        %s106 = smul.u32 4, %s8
        %p107 = scmp.lt.s32.totalorder %s106, 15
        %s108 = scalar_select %p107, %s106, 15
        %s109 = smul.addr %s108, 8
        %s110 = scalar_lea.vmem %s0, %s109
        %s111 = smul.u32 4, %s8
      $region24: #{tpu_custom_call.1} parent=19 // pred_fallthru
        _
    $region20: #{tpu_custom_call.1} parent=5 // pred_fallthru
      _
    %p112 = scmp.le.s32.totalorder 1, %s8
    %p113 = scmp.lt.s32.totalorder %s8, 5
    %p114 = pnand %p112, %p113
    %p115 = pneg %p114
    // Predicated region
    $region25: #{tpu_custom_call.1} parent=5 // pred_check
      _
    $region26: #{tpu_custom_call.1} parent=5 // pred_check_branch
      %117 = sbr.rel (%p114) target = $region28
    $region27: #{tpu_custom_call.1} parent=5 // pred_region
      %s118 = ssub.s32 %s8, 1
      %s119 = smul.u32 4, %s13
      %p120 = scmp.lt.s32.totalorder %s119, 15
      %s121 = scalar_select %p120, %s119, 15
      %s122 = smul.addr %s121, 8
      %s123 = scalar_lea.vmem %s0, %s122
      %p124 = pneg %p34
      %p125 = pneg %p31
      %p126 = pneg %p55
      %p127 = pneg %p52
      %p128 = pneg %p81
      %p129 = pneg %p78
      %s130 = smul.u32 4, %s13
      %p131 = scmp.lt.s32.totalorder %s130, 15
      %s132 = scalar_select %p131, %s130, 15
      %s133 = smul.addr %s132, 8
      %s134 = scalar_lea.vmem %s2, %s133
      %s135 = smul.u32 4, %s13
      %p136 = scmp.lt.s32.totalorder %s135, 15
      %s137 = scalar_select %p136, %s135, 15
      %s138 = smul.addr %s137, 8
      %s139 = scalar_lea.vmem %s0, %s138
      %s140 = smul.u32 4, %s13
      %s141 = smul.u32 4, %s13
      %p142 = scmp.lt.s32.totalorder %s141, 15
      %s143 = scalar_select %p142, %s141, 15
      %s144 = smul.addr %s143, 8
      %s145 = scalar_lea.vmem %s2, %s144
      %s146 = smul.u32 4, %s13
      %v147 = vld [vmem:[%s139] sm:$0xff]
      %v148 = vld [vmem:[%s139 + $0x8] sm:$0xff]
      %v149 = vld [vmem:[%s139 + $0x10] sm:$0xff]
      %v150 = vld [vmem:[%s139 + $0x18] sm:$0xff]
      %v151 = vld [vmem:[%s1] sm:$0xf]
      %153 = vset.pattern.permute.xlu0 0
      %154 = vperm.xlu0 %153, %v147
      %v155 = vpop.permute.xlu0 %154
      %158 = vset.pattern.permute.xlu0 0
      %159 = vperm.xlu0 %158, %v148
      %v160 = vpop.permute.xlu0 %159
      %163 = vset.pattern.permute.xlu0 0
      %164 = vperm.xlu0 %163, %v149
      %v165 = vpop.permute.xlu0 %164
      %168 = vset.pattern.permute.xlu0 0
      %169 = vperm.xlu0 %168, %v150
      %v170 = vpop.permute.xlu0 %169
      %v172 = vlaneseq
      %v173 = vshrl.u32 %v172, 7
      %v174 = vsub.s32 0, %v173
      %v175 = vrot.slane %v151, %v174
      %v176 = vsub.f32 %v155, %v175
      %v177 = vsub.f32 %v160, %v175
      %v178 = vsub.f32 %v165, %v175
      %v179 = vsub.f32 %v170, %v175
      %v180 = vlaneseq
      %v181 = vshrl.u32 %v180, 7
      %v182 = vsub.s32 1, %v181
      %v183 = vrot.slane %v151, %v182
      %v184 = vmul.f32 %v183, %v176
      %v185 = vmul.f32 %v183, %v177
      %v186 = vmul.f32 %v183, %v178
      %v187 = vmul.f32 %v183, %v179
      %v188 = vand.u32 2147483647, %v176
      %v189 = vand.u32 2147483647, %v177
      %v190 = vand.u32 2147483647, %v178
      %v191 = vand.u32 2147483647, %v179
      %v192 = vlaneseq
      %v193 = vshrl.u32 %v192, 7
      %v194 = vsub.s32 2, %v193
      %v195 = vrot.slane %v151, %v194
      %v196 = vmul.f32 %v195, %v188
      %v197 = vmul.f32 %v195, %v189
      %v198 = vmul.f32 %v195, %v190
      %v199 = vmul.f32 %v195, %v191
      %v200 = vadd.f32 %v184, %v196
      %v201 = vadd.f32 %v185, %v197
      %v202 = vadd.f32 %v186, %v198
      %v203 = vadd.f32 %v187, %v199
      %v204 = vlaneseq
      %v205 = vshrl.u32 %v204, 7
      %v206 = vsub.s32 3, %v205
      %v207 = vrot.slane %v151, %v206
      %v208 = vadd.f32 %v200, %v207
      %v209 = vadd.f32 %v201, %v207
      %v210 = vadd.f32 %v202, %v207
      %v211 = vadd.f32 %v203, %v207
      %v212 = vsub.f32 0.0, %v208
      %v213 = vsub.f32 0.0, %v209
      %v214 = vsub.f32 0.0, %v210
      %v215 = vsub.f32 0.0, %v211
      %v216 = vmul.f32 %v212, 1.442695
      %v217 = vpow.pop %v216
      %v218 = vmul.f32 %v213, 1.442695
      %v219 = vpow.pop %v218
      %v220 = vmul.f32 %v214, 1.442695
      %v221 = vpow.pop %v220
      %v222 = vmul.f32 %v215, 1.442695
      %v223 = vpow.pop %v222
      %v224 = vadd.f32 %v217, 1.0
      %v225 = vadd.f32 %v219, 1.0
      %v226 = vadd.f32 %v221, 1.0
      %v227 = vadd.f32 %v223, 1.0
      %v228 = vrcp.pop %v224
      %v229 = vmul.f32 %v208, %v228
      %v230 = vrcp.pop %v225
      %v231 = vmul.f32 %v209, %v230
      %v232 = vrcp.pop %v226
      %v233 = vmul.f32 %v210, %v232
      %v234 = vrcp.pop %v227
      %v235 = vmul.f32 %v211, %v234
      %vm236 = vcmask 130048
      %237 = vst.msk [vmem:[%s145] sm:$0xff] %vm236, %v229
      %238 = vst.msk [vmem:[%s145 + $0x8] sm:$0xff] %vm236, %v231
      %239 = vst.msk [vmem:[%s145 + $0x10] sm:$0xff] %vm236, %v233
      %240 = vst.msk [vmem:[%s145 + $0x18] sm:$0xff] %vm236, %v235
      %s241 = smul.u32 4, %s13
      %p242 = scmp.lt.s32.totalorder %s241, 15
      %s243 = scalar_select %p242, %s241, 15
      %s244 = smul.addr %s243, 8
      %s245 = scalar_lea.vmem %s2, %s244
      // Predicated region
      $region29: #{tpu_custom_call.1} parent=27 // pred_check
        %p246 = pneg %p78
      $region30: #{tpu_custom_call.1} parent=27 // pred_check_branch
        %248 = sbr.rel (%p246) target = $region32
      $region31: #{tpu_custom_call.1} parent=27 // pred_region
        %s249 = smul.u32 4, %s13
      $region32: #{tpu_custom_call.1} parent=27 // pred_fallthru
        _
    $region28: #{tpu_custom_call.1} parent=5 // pred_fallthru
      _
    %p250 = scmp.le.s32.totalorder 2, %s8
    // Predicated region
    $region33: #{tpu_custom_call.1} parent=5 // pred_check
      %p251 = pneg %p250
    $region34: #{tpu_custom_call.1} parent=5 // pred_check_branch
      %253 = sbr.rel (%p251) target = $region36
    $region35: #{tpu_custom_call.1} parent=5 // pred_region
      %s254 = ssub.s32 %s8, 2
      // Predicated region
      $region37: #{tpu_custom_call.1} parent=35 // pred_check
        %p255 = pneg %p84
      $region38: #{tpu_custom_call.1} parent=35 // pred_check_branch
        %257 = sbr.rel (%p255) target = $region40
      $region39: #{tpu_custom_call.1} parent=35 // pred_region
        %s258 = smul.u32 4, %s14
        %p259 = scmp.lt.s32.totalorder %s258, 15
        %s260 = scalar_select %p259, %s258, 15
        %s261 = smul.addr %s260, 8
        %s262 = scalar_lea.vmem %s2, %s261
      $region40: #{tpu_custom_call.1} parent=35 // pred_fallthru
        _
    $region36: #{tpu_custom_call.1} parent=5 // pred_fallthru
      _
  $region6: #{tpu_custom_call.1} parent=0 // loop_footer
    %s12 = sadd.s32 1, %s8
  $region7: #{tpu_custom_call.1} parent=0 // loop_footer_branch
    %7 = sbr.rel target = $region3
  $region8: #{tpu_custom_call.1} parent=0 // loop_exit
    _

</llo_original>
